<compile_context>
chip_gen: v7x
topology: tpu7x:2x2x1
jax: 0.10.0
libtpu: 0.0.40
codegen_flags: <defaults>
</compile_context>

<pallas_src>
import functools

import jax
import jax.numpy as jnp
from jax.experimental import pallas as pl
from jax.experimental.pallas import tpu as pltpu

LANE = 128          # TPU lane width; output is padded to this for lane-dense stores
MAX_TILE_B = 2048   # 1 MiB padded-output tile per buffer -> safe on v5e/v6e/v7x VMEM


def _round_up(n, m):
    return ((n + m - 1) // m) * m


def mlp_kernel(x_ref, w1_ref, b1_ref, w2_ref, b2_ref, w3p_ref, b3p_ref, o_ref):
    x = x_ref[...]                         # (TILE_B, K1) f32, K1 = 4
    w1 = w1_ref[...]                       # (K1, H1)
    k1 = w1_ref.shape[0]

    # fc1 on the VPU: K=4 contraction unrolled as broadcast FMAs (an MXU pass here
    # would be almost entirely zero padding).
    h1 = b1_ref[...] + x[:, 0:1] * w1[0:1, :]          # (TILE_B, H1)
    for k in range(1, k1):
        h1 = h1 + x[:, k:k + 1] * w1[k:k + 1, :]
    h1 = jnp.maximum(h1, 0.0)

    # fc2 + ReLU on the MXU.
    h2 = jnp.dot(h1, w2_ref[...], preferred_element_type=jnp.float32) + b2_ref[...]
    h2 = jnp.maximum(h2, 0.0)                          # (TILE_B, H2)

    # Output layer on the MXU; weights pre-padded to 128 lanes -> lane-dense store.
    y = jnp.dot(h2, w3p_ref[...], preferred_element_type=jnp.float32) + b3p_ref[...]
    o_ref[...] = y.astype(o_ref.dtype)                 # (TILE_B, 128)


@functools.partial(jax.jit)
def mlp_forward(x, w1, b1, w2, b2, w3, b3):
    B, in_features = x.shape
    out_features = w3.shape[1]

    # Tile the batch: multiple of 8 sublanes, capped for VMEM headroom.
    tile_b = min(MAX_TILE_B, _round_up(max(B, 1), 8))
    b_pad = _round_up(max(B, 1), tile_b)
    if b_pad != B:
        x = jnp.pad(x, ((0, b_pad - B), (0, 0)))

    # Pad the output projection to a full lane width (zero columns are discarded
    # after the call); this makes the writeback DMA lane-dense (unmasked vst).
    n_pad = LANE
    w3p = jnp.pad(w3, ((0, 0), (0, n_pad - out_features)))
    b3p = jnp.pad(b3, ((0, 0), (0, n_pad - out_features)))

    # Weights/biases: same block every grid step -> loaded once, resident in VMEM.
    resident = lambda a: pl.BlockSpec(a.shape, lambda i: (0,) * a.ndim)

    out_padded = pl.pallas_call(
        mlp_kernel,
        out_shape=jax.ShapeDtypeStruct((b_pad, n_pad), x.dtype),
        grid=(b_pad // tile_b,),
        in_specs=[
            pl.BlockSpec((tile_b, in_features), lambda i: (i, 0)),  # x: tiled on batch
            resident(w1), resident(b1),
            resident(w2), resident(b2),
            resident(w3p), resident(b3p),
        ],
        out_specs=pl.BlockSpec((tile_b, n_pad), lambda i: (i, 0)),
        compiler_params=pltpu.CompilerParams(
            dimension_semantics=("parallel",),
        ),
    )(x, w1, b1, w2, b2, w3p, b3p)

    return out_padded[:B, :out_features]


def init_params(key, input_features=4, hidden1=25, hidden2=30, output_features=3):
    # Deterministic init mimicking nn.Linear's uniform(-1/sqrt(fan_in), 1/sqrt(fan_in)).
    # Weights stored as (in_features, out_features) so y = x @ W + b.
    ks = jax.random.split(key, 6)

    def linear(kw, kb, fan_in, fan_out):
        bound = 1.0 / jnp.sqrt(fan_in)
        w = jax.random.uniform(kw, (fan_in, fan_out), jnp.float32, -bound, bound)
        b = jax.random.uniform(kb, (1, fan_out), jnp.float32, -bound, bound)
        return w, b

    w1, b1 = linear(ks[0], ks[1], input_features, hidden1)
    w2, b2 = linear(ks[2], ks[3], hidden1, hidden2)
    w3, b3 = linear(ks[4], ks[5], hidden2, output_features)
    return w1, b1, w2, b2, w3, b3


def _reference(x, w1, b1, w2, b2, w3, b3):
    h = jnp.maximum(x @ w1 + b1, 0.0)
    h = jnp.maximum(h @ w2 + b2, 0.0)
    return h @ w3 + b3


if __name__ == "__main__":
    key = jax.random.PRNGKey(0)
    k_x, k_x2, k_p = jax.random.split(key, 3)

    w1, b1, w2, b2, w3, b3 = init_params(k_p)

    # Small batch (matches the module's tiny feature sizes).
    batch = 8
    x = jax.random.normal(k_x, (batch, 4), jnp.float32)
    out = jax.block_until_ready(mlp_forward(x, w1, b1, w2, b2, w3, b3))
    ref = _reference(x, w1, b1, w2, b2, w3, b3)
    assert out.shape == (batch, 3)
    assert jnp.allclose(out, ref, atol=1e-5, rtol=1e-5)

    # Non-multiple-of-8 batch exercises the padding / remainder path.
    batch2 = 37
    x2 = jax.random.normal(k_x2, (batch2, 4), jnp.float32)
    out2 = jax.block_until_ready(mlp_forward(x2, w1, b1, w2, b2, w3, b3))
    ref2 = _reference(x2, w1, b1, w2, b2, w3, b3)
    assert out2.shape == (batch2, 3)
    assert jnp.allclose(out2, ref2, atol=1e-5, rtol=1e-5)

    print("KERNEL_OK")
</pallas_src>

<mosaic_0001>
module attributes {stable_mosaic.version = 11 : i64} {
  func.func @mlp_kernel(%arg0: i32, %arg1: memref<8x4xf32, #tpu.memory_space<vmem>>, %arg2: memref<4x25xf32, #tpu.memory_space<vmem>>, %arg3: memref<1x25xf32, #tpu.memory_space<vmem>>, %arg4: memref<25x30xf32, #tpu.memory_space<vmem>>, %arg5: memref<1x30xf32, #tpu.memory_space<vmem>>, %arg6: memref<30x128xf32, #tpu.memory_space<vmem>>, %arg7: memref<1x128xf32, #tpu.memory_space<vmem>>, %arg8: memref<8x128xf32, #tpu.memory_space<vmem>>) attributes {dimension_semantics = [#tpu.dimension_semantics<parallel>], iteration_bounds = array<i64: 1>, scalar_prefetch = 0 : i64, scratch_operands = 0 : i64, tpu.core_type = #tpu.core_type<tc>, window_params = [{transform_indices = @transform_0, window_bounds = array<i64: 8, 4>}, {pipeline_mode = #tpu.pipeline_mode<synchronous>, transform_indices = @transform_1, window_bounds = array<i64: 4, 25>}, {pipeline_mode = #tpu.pipeline_mode<synchronous>, transform_indices = @transform_2, window_bounds = array<i64: 1, 25>}, {pipeline_mode = #tpu.pipeline_mode<synchronous>, transform_indices = @transform_3, window_bounds = array<i64: 25, 30>}, {pipeline_mode = #tpu.pipeline_mode<synchronous>, transform_indices = @transform_4, window_bounds = array<i64: 1, 30>}, {pipeline_mode = #tpu.pipeline_mode<synchronous>, transform_indices = @transform_5, window_bounds = array<i64: 30, 128>}, {pipeline_mode = #tpu.pipeline_mode<synchronous>, transform_indices = @transform_6, window_bounds = array<i64: 1, 128>}, {transform_indices = @transform_7, window_bounds = array<i64: 8, 128>}]} {
    %c0 = arith.constant 0 : index
    %c0_0 = arith.constant 0 : index
    %0 = vector.load %arg1[%c0, %c0_0] : memref<8x4xf32, #tpu.memory_space<vmem>>, vector<8x4xf32>
    %c0_1 = arith.constant 0 : index
    %c0_2 = arith.constant 0 : index
    %1 = vector.load %arg2[%c0_1, %c0_2] : memref<4x25xf32, #tpu.memory_space<vmem>>, vector<4x25xf32>
    %c0_3 = arith.constant 0 : index
    %c0_4 = arith.constant 0 : index
    %2 = vector.load %arg3[%c0_3, %c0_4] : memref<1x25xf32, #tpu.memory_space<vmem>>, vector<1x25xf32>
    %3 = vector.extract_strided_slice %0 {offsets = [0, 0], sizes = [8, 1], strides = [1, 1]} : vector<8x4xf32> to vector<8x1xf32>
    %4 = vector.extract_strided_slice %1 {offsets = [0, 0], sizes = [1, 25], strides = [1, 1]} : vector<4x25xf32> to vector<1x25xf32>
    %5 = vector.broadcast %3 : vector<8x1xf32> to vector<8x25xf32>
    %6 = vector.broadcast %4 : vector<1x25xf32> to vector<8x25xf32>
    %7 = arith.mulf %5, %6 : vector<8x25xf32>
    %8 = vector.broadcast %2 : vector<1x25xf32> to vector<8x25xf32>
    %9 = arith.addf %8, %7 : vector<8x25xf32>
    %10 = vector.extract_strided_slice %0 {offsets = [0, 1], sizes = [8, 1], strides = [1, 1]} : vector<8x4xf32> to vector<8x1xf32>
    %11 = vector.extract_strided_slice %1 {offsets = [1, 0], sizes = [1, 25], strides = [1, 1]} : vector<4x25xf32> to vector<1x25xf32>
    %12 = vector.broadcast %10 : vector<8x1xf32> to vector<8x25xf32>
    %13 = vector.broadcast %11 : vector<1x25xf32> to vector<8x25xf32>
    %14 = arith.mulf %12, %13 : vector<8x25xf32>
    %15 = arith.addf %9, %14 : vector<8x25xf32>
    %16 = vector.extract_strided_slice %0 {offsets = [0, 2], sizes = [8, 1], strides = [1, 1]} : vector<8x4xf32> to vector<8x1xf32>
    %17 = vector.extract_strided_slice %1 {offsets = [2, 0], sizes = [1, 25], strides = [1, 1]} : vector<4x25xf32> to vector<1x25xf32>
    %18 = vector.broadcast %16 : vector<8x1xf32> to vector<8x25xf32>
    %19 = vector.broadcast %17 : vector<1x25xf32> to vector<8x25xf32>
    %20 = arith.mulf %18, %19 : vector<8x25xf32>
    %21 = arith.addf %15, %20 : vector<8x25xf32>
    %22 = vector.extract_strided_slice %0 {offsets = [0, 3], sizes = [8, 1], strides = [1, 1]} : vector<8x4xf32> to vector<8x1xf32>
    %23 = vector.extract_strided_slice %1 {offsets = [3, 0], sizes = [1, 25], strides = [1, 1]} : vector<4x25xf32> to vector<1x25xf32>
    %24 = vector.broadcast %22 : vector<8x1xf32> to vector<8x25xf32>
    %25 = vector.broadcast %23 : vector<1x25xf32> to vector<8x25xf32>
    %26 = arith.mulf %24, %25 : vector<8x25xf32>
    %27 = arith.addf %21, %26 : vector<8x25xf32>
    %cst = arith.constant 0.000000e+00 : f32
    %28 = vector.broadcast %cst : f32 to vector<8x25xf32>
    %29 = arith.maximumf %27, %28 : vector<8x25xf32>
    %c0_5 = arith.constant 0 : index
    %c0_6 = arith.constant 0 : index
    %30 = vector.load %arg4[%c0_5, %c0_6] : memref<25x30xf32, #tpu.memory_space<vmem>>, vector<25x30xf32>
    %cst_7 = arith.constant dense<0.000000e+00> : vector<8x30xf32>
    %31 = tpu.matmul %29, %30, %cst_7 {dimension_numbers = #tpu.dot_dimension_numbers<[1], [0], [0], [1], [0, 0, 1, 1], [], []>} : vector<8x25xf32>, vector<25x30xf32>, vector<8x30xf32> -> vector<8x30xf32>
    %c0_8 = arith.constant 0 : index
    %c0_9 = arith.constant 0 : index
    %32 = vector.load %arg5[%c0_8, %c0_9] : memref<1x30xf32, #tpu.memory_space<vmem>>, vector<1x30xf32>
    %33 = vector.broadcast %32 : vector<1x30xf32> to vector<8x30xf32>
    %34 = arith.addf %31, %33 : vector<8x30xf32>
    %cst_10 = arith.constant 0.000000e+00 : f32
    %35 = vector.broadcast %cst_10 : f32 to vector<8x30xf32>
    %36 = arith.maximumf %34, %35 : vector<8x30xf32>
    %c0_11 = arith.constant 0 : index
    %c0_12 = arith.constant 0 : index
    %37 = vector.load %arg6[%c0_11, %c0_12] : memref<30x128xf32, #tpu.memory_space<vmem>>, vector<30x128xf32>
    %cst_13 = arith.constant dense<0.000000e+00> : vector<8x128xf32>
    %38 = tpu.matmul %36, %37, %cst_13 {dimension_numbers = #tpu.dot_dimension_numbers<[1], [0], [0], [1], [0, 0, 1, 1], [], []>} : vector<8x30xf32>, vector<30x128xf32>, vector<8x128xf32> -> vector<8x128xf32>
    %c0_14 = arith.constant 0 : index
    %c0_15 = arith.constant 0 : index
    %39 = vector.load %arg7[%c0_14, %c0_15] : memref<1x128xf32, #tpu.memory_space<vmem>>, vector<1x128xf32>
    %40 = vector.broadcast %39 : vector<1x128xf32> to vector<8x128xf32>
    %41 = arith.addf %38, %40 : vector<8x128xf32>
    %c0_16 = arith.constant 0 : index
    %c0_17 = arith.constant 0 : index
    %42 = vector.load %arg8[%c0_16, %c0_17] : memref<8x128xf32, #tpu.memory_space<vmem>>, vector<8x128xf32>
    tpu.vector_store %arg8[%c0_16, %c0_17], %41 {strides = array<i32>} : memref<8x128xf32, #tpu.memory_space<vmem>>, vector<8x128xf32>,
    return
  }
  func.func @transform_0(%arg0: i32) -> (i32, i32) {
    %c0_i32 = arith.constant 0 : i32
    %c0_i32_0 = arith.constant 0 : i32
    return %arg0, %c0_i32 : i32, i32
  }
  func.func @transform_1(%arg0: i32) -> (i32, i32) {
    %c0_i32 = arith.constant 0 : i32
    %c0_i32_0 = arith.constant 0 : i32
    %c0_i32_1 = arith.constant 0 : i32
    return %c0_i32, %c0_i32_0 : i32, i32
  }
  func.func @transform_2(%arg0: i32) -> (i32, i32) {
    %c0_i32 = arith.constant 0 : i32
    %c0_i32_0 = arith.constant 0 : i32
    %c0_i32_1 = arith.constant 0 : i32
    return %c0_i32, %c0_i32_0 : i32, i32
  }
  func.func @transform_3(%arg0: i32) -> (i32, i32) {
    %c0_i32 = arith.constant 0 : i32
    %c0_i32_0 = arith.constant 0 : i32
    %c0_i32_1 = arith.constant 0 : i32
    return %c0_i32, %c0_i32_0 : i32, i32
  }
  func.func @transform_4(%arg0: i32) -> (i32, i32) {
    %c0_i32 = arith.constant 0 : i32
    %c0_i32_0 = arith.constant 0 : i32
    %c0_i32_1 = arith.constant 0 : i32
    return %c0_i32, %c0_i32_0 : i32, i32
  }
  func.func @transform_5(%arg0: i32) -> (i32, i32) {
    %c0_i32 = arith.constant 0 : i32
    %c0_i32_0 = arith.constant 0 : i32
    %c0_i32_1 = arith.constant 0 : i32
    return %c0_i32, %c0_i32_0 : i32, i32
  }
  func.func @transform_6(%arg0: i32) -> (i32, i32) {
    %c0_i32 = arith.constant 0 : i32
    %c0_i32_0 = arith.constant 0 : i32
    %c0_i32_1 = arith.constant 0 : i32
    return %c0_i32, %c0_i32_0 : i32, i32
  }
  func.func @transform_7(%arg0: i32) -> (i32, i32) {
    %c0_i32 = arith.constant 0 : i32
    %c0_i32_0 = arith.constant 0 : i32
    return %arg0, %c0_i32 : i32, i32
  }
}

</mosaic_0001>

<llo_original>
// kernel: mlp_forward.1
$region0: #{mlp_forward.1}
  #allocation0 [shape = 'u32[]', space=smem, size = 0x4, offset = 0x4, fixed_abs, tag = 'smem constant byte address 0x4 - core index']
  #allocation1 [shape = 'u32[144,128]{1,0:T(1,128)}', space=vmem, size = 0x12000, scoped, tag = 'internal scratch']
  %s0 = inlined_call_operand.vmem [shape: f32[8,4], index: 0, kind: input, shape index: {}]
  %s1 = inlined_call_operand.vmem [shape: f32[4,25], index: 1, kind: input, shape index: {}]
  %s2 = inlined_call_operand.vmem [shape: f32[1,25], index: 2, kind: input, shape index: {}]
  %s3 = inlined_call_operand.vmem [shape: f32[25,30], index: 3, kind: input, shape index: {}]
  %s4 = inlined_call_operand.vmem [shape: f32[1,30], index: 4, kind: input, shape index: {}]
  %s5 = inlined_call_operand.vmem [shape: f32[30,128], index: 5, kind: input, shape index: {}]
  %s6 = inlined_call_operand.vmem [shape: f32[1,128], index: 6, kind: input, shape index: {}]
  %s7 = inlined_call_operand.vmem [shape: f32[8,128], index: 7, kind: output, shape index: {}]
  %s8 = sld [smem:[#allocation0]]
  $region38: #{mlp_forward.1} parent=0
    _
  %s10 = ssub.s32 1, %s8
  %s11 = scalar_select 0, %s10, %s8
  // Predicated region
  $region2: #{mlp_forward.1} parent=0 // pred_check
    _
  $region3: #{mlp_forward.1} parent=0 // pred_check_branch
    %13 = sbr.rel (0) target = $region5
  $region4: #{mlp_forward.1} parent=0 // pred_region
    _
  $region5: #{mlp_forward.1} parent=0 // pred_fallthru
    _
  // Predicated region
  $region6: #{mlp_forward.1} parent=0 // pred_check
    _
  $region7: #{mlp_forward.1} parent=0 // pred_check_branch
    %15 = sbr.rel (0) target = $region9
  $region8: #{mlp_forward.1} parent=0 // pred_region
    _
  $region9: #{mlp_forward.1} parent=0 // pred_fallthru
    _
  // Predicated region
  $region10: #{mlp_forward.1} parent=0 // pred_check
    _
  $region11: #{mlp_forward.1} parent=0 // pred_check_branch
    %17 = sbr.rel (0) target = $region13
  $region12: #{mlp_forward.1} parent=0 // pred_region
    _
  $region13: #{mlp_forward.1} parent=0 // pred_fallthru
    _
  // Predicated region
  $region14: #{mlp_forward.1} parent=0 // pred_check
    _
  $region15: #{mlp_forward.1} parent=0 // pred_check_branch
    %19 = sbr.rel (0) target = $region17
  $region16: #{mlp_forward.1} parent=0 // pred_region
    _
  $region17: #{mlp_forward.1} parent=0 // pred_fallthru
    _
  // Predicated region
  $region18: #{mlp_forward.1} parent=0 // pred_check
    _
  $region19: #{mlp_forward.1} parent=0 // pred_check_branch
    %21 = sbr.rel (0) target = $region21
  $region20: #{mlp_forward.1} parent=0 // pred_region
    _
  $region21: #{mlp_forward.1} parent=0 // pred_fallthru
    _
  // Predicated region
  $region22: #{mlp_forward.1} parent=0 // pred_check
    _
  $region23: #{mlp_forward.1} parent=0 // pred_check_branch
    %23 = sbr.rel (0) target = $region25
  $region24: #{mlp_forward.1} parent=0 // pred_region
    _
  $region25: #{mlp_forward.1} parent=0 // pred_fallthru
    _
  // Predicated region
  $region26: #{mlp_forward.1} parent=0 // pred_check
    _
  $region27: #{mlp_forward.1} parent=0 // pred_check_branch
    %25 = sbr.rel (0) target = $region29
  $region28: #{mlp_forward.1} parent=0 // pred_region
    _
  $region29: #{mlp_forward.1} parent=0 // pred_fallthru
    _
  %v26 = vld [vmem:[%s0] sm:$0xff]
  %v27 = vld [vmem:[%s1] sm:$0xf]
  %v28 = vld [vmem:[%s2] sm:$0x1]
  %30 = vset.pattern.permute.xlu0 0
  %31 = vperm.xlu0 %30, %v26
  %v32 = vpop.permute.xlu0 %31
  %v34 = vlaneseq
  %v35 = vshrl.u32 %v34, 7
  %v36 = vsub.s32 0, %v35
  %v37 = vrot.slane %v27, %v36
  %v38 = vmul.f32 %v32, %v37
  %v40 = vlaneseq
  %v41 = vshrl.u32 %v40, 7
  %v42 = vsub.s32 0, %v41
  %v43 = vrot.slane %v28, %v42
  %v45 = vadd.f32 %v43, %v38
  %46 = vset.pattern.permute.xlu0 1
  %47 = vperm.xlu0 %46, %v26
  %v48 = vpop.permute.xlu0 %47
  %v50 = vlaneseq
  %v51 = vshrl.u32 %v50, 7
  %v52 = vsub.s32 1, %v51
  %v53 = vrot.slane %v27, %v52
  %v54 = vmul.f32 %v48, %v53
  %v55 = vadd.f32 %v45, %v54
  %56 = vset.pattern.permute.xlu0 2
  %57 = vperm.xlu0 %56, %v26
  %v58 = vpop.permute.xlu0 %57
  %v60 = vlaneseq
  %v61 = vshrl.u32 %v60, 7
  %v62 = vsub.s32 2, %v61
  %v63 = vrot.slane %v27, %v62
  %v64 = vmul.f32 %v58, %v63
  %v65 = vadd.f32 %v55, %v64
  %66 = vset.pattern.permute.xlu0 3
  %67 = vperm.xlu0 %66, %v26
  %v68 = vpop.permute.xlu0 %67
  %v70 = vlaneseq
  %v71 = vshrl.u32 %v70, 7
  %v72 = vsub.s32 3, %v71
  %v73 = vrot.slane %v27, %v72
  %v74 = vmul.f32 %v68, %v73
  %v75 = vadd.f32 %v65, %v74
  %v76 = vmax.f32 %v75, 0.0
  %v77 = vld [vmem:[%s3] sm:$0xff]
  %v78 = vld [vmem:[%s3 + $0x8] sm:$0xff]
  %v79 = vld [vmem:[%s3 + $0x10] sm:$0xff]
  %v80 = vld [vmem:[%s3 + $0x18] sm:$0x1]
  %v81 = vld [vmem:[%s4] sm:$0x1]
  %v83 = vlaneseq
  %v84 = vshrl.u32 %v83, 7
  %v85 = vsub.s32 0, %v84
  %v86 = vrot.slane %v81, %v85
  %vm88 = vcmask 203776
  %v90 = vsel %vm88, %v76, 0
  %vm92 = vcmask 1040384
  %v94 = vsel %vm92, %v80, 0
  %96 = vmatprep.subr.mxu0 0.0
  %97 = vmatpush1.msra.mxu0 %v77
  %98 = vmatprep.subr.mxu0 0.0
  %99 = vmatpush1.msra.mxu0 %v78
  %100 = vmatprep.subr.mxu0 0.0
  %101 = vmatpush1.msra.mxu0 %v79
  %102 = vmatprep.subr.mxu0 0.0
  %103 = vmatpush1.msra.mxu0 %v94
  %104 = vmatprep.subr.mxu0 0.0
  %105 = vmatpush1.msra.mxu0 0.0
  %106 = vmatprep.subr.mxu0 0.0
  %107 = vmatpush1.msra.mxu0 0.0
  %108 = vmatprep.subr.mxu0 0.0
  %109 = vmatpush1.msra.mxu0 0.0
  %110 = vmatprep.subr.mxu0 0.0
  %111 = vmatpush1.msra.mxu0 0.0
  %112 = vmatprep.subr.mxu0 0.0
  %113 = vmatpush1.msra.mxu0 0.0
  %114 = vmatprep.subr.mxu0 0.0
  %115 = vmatpush1.msra.mxu0 0.0
  %116 = vmatprep.subr.mxu0 0.0
  %117 = vmatpush1.msra.mxu0 0.0
  %118 = vmatprep.subr.mxu0 0.0
  %119 = vmatpush1.msra.mxu0 0.0
  %120 = vmatprep.subr.mxu0 0.0
  %121 = vmatpush1.msra.mxu0 0.0
  %122 = vmatprep.subr.mxu0 0.0
  %123 = vmatpush1.msra.mxu0 0.0
  %124 = vmatprep.subr.mxu0 0.0
  %125 = vmatpush1.msra.mxu0 0.0
  %126 = vmatprep.subr.mxu0 0.0
  %127 = vmatpush1.msra.mxu0 0.0
  %128 = vmatprep.subr.mxu0 0.0
  %129 = vmatpush1.msra.mxu0 0.0
  %130 = vmatprep.subr.mxu0 0.0
  %131 = vmatpush1.msra.mxu0 0.0
  %132 = vmatprep.subr.mxu0 0.0
  %133 = vmatpush1.msra.mxu0 0.0
  %134 = vmatprep.subr.mxu0 0.0
  %135 = vmatpush1.msra.mxu0 0.0
  %136 = vmatprep.subr.mxu0 0.0
  %137 = vmatpush1.msra.mxu0 0.0
  %138 = vmatprep.subr.mxu0 0.0
  %139 = vmatpush1.msra.mxu0 0.0
  %140 = vmatprep.subr.mxu0 0.0
  %141 = vmatpush1.msra.mxu0 0.0
  %142 = vmatprep.subr.mxu0 0.0
  %143 = vmatpush1.msra.mxu0 0.0
  %144 = vmatprep.subr.mxu0 0.0
  %145 = vmatpush1.msra.mxu0 0.0
  %146 = vmatprep.subr.mxu0 0.0
  %147 = vmatpush1.msra.mxu0 0.0
  %148 = vmatprep.subr.mxu0 0.0
  %149 = vmatpush1.msra.mxu0 0.0
  %150 = vmatprep.subr.mxu0 0.0
  %151 = vmatpush1.msra.mxu0 0.0
  %152 = vmatprep.subr.mxu0 0.0
  %153 = vmatpush1.msra.mxu0 0.0
  %154 = vmatprep.subr.mxu0 0.0
  %155 = vmatpush1.msra.mxu0 0.0
  %156 = vmatprep.subr.mxu0 0.0
  %157 = vmatpush1.msra.mxu0 0.0
  %158 = vmatprep.subr.mxu0 0.0
  %159 = vmatpush1.msra.mxu0 0.0
  %160 = vmatprep.mubr.f32.mxu0 0.0
  %161 = vmatmul.mubr.f32.gmra.mrb[0].mxu0 %v90
  %v162 = vpop.f32.mrb[0].mxu0
  %v163 = vadd.f32 %v86, %v162
  %v164 = vpop.f32.mrb[0].mxu0
  %165 = vdwg.mxu0
  %v166 = vmax.f32 %v163, 0.0
  %v167 = vld [vmem:[%s5] sm:$0xff]
  %v168 = vld [vmem:[%s5 + $0x8] sm:$0xff]
  %v169 = vld [vmem:[%s5 + $0x10] sm:$0xff]
  %v170 = vld [vmem:[%s5 + $0x18] sm:$0x3f]
  %v171 = vld [vmem:[%s6] sm:$0x1]
  %v173 = vlaneseq
  %v174 = vshrl.u32 %v173, 7
  %v175 = vsub.s32 0, %v174
  %v176 = vrot.slane %v171, %v175
  %vm178 = vcmask 244736
  %v180 = vsel %vm178, %v166, 0
  %vm182 = vcmask 1045504
  %v184 = vsel %vm182, %v170, 0
  %186 = vmatprep.subr.mxu0 0.0
  %187 = vmatpush1.msra.mxu0 %v167
  %188 = vmatprep.subr.mxu0 0.0
  %189 = vmatpush1.msra.mxu0 %v168
  %190 = vmatprep.subr.mxu0 0.0
  %191 = vmatpush1.msra.mxu0 %v169
  %192 = vmatprep.subr.mxu0 0.0
  %193 = vmatpush1.msra.mxu0 %v184
  %194 = vmatprep.subr.mxu0 0.0
  %195 = vmatpush1.msra.mxu0 0.0
  %196 = vmatprep.subr.mxu0 0.0
  %197 = vmatpush1.msra.mxu0 0.0
  %198 = vmatprep.subr.mxu0 0.0
  %199 = vmatpush1.msra.mxu0 0.0
  %200 = vmatprep.subr.mxu0 0.0
  %201 = vmatpush1.msra.mxu0 0.0
  %202 = vmatprep.subr.mxu0 0.0
  %203 = vmatpush1.msra.mxu0 0.0
  %204 = vmatprep.subr.mxu0 0.0
  %205 = vmatpush1.msra.mxu0 0.0
  %206 = vmatprep.subr.mxu0 0.0
  %207 = vmatpush1.msra.mxu0 0.0
  %208 = vmatprep.subr.mxu0 0.0
  %209 = vmatpush1.msra.mxu0 0.0
  %210 = vmatprep.subr.mxu0 0.0
  %211 = vmatpush1.msra.mxu0 0.0
  %212 = vmatprep.subr.mxu0 0.0
  %213 = vmatpush1.msra.mxu0 0.0
  %214 = vmatprep.subr.mxu0 0.0
  %215 = vmatpush1.msra.mxu0 0.0
  %216 = vmatprep.subr.mxu0 0.0
  %217 = vmatpush1.msra.mxu0 0.0
  %218 = vmatprep.subr.mxu0 0.0
  %219 = vmatpush1.msra.mxu0 0.0
  %220 = vmatprep.subr.mxu0 0.0
  %221 = vmatpush1.msra.mxu0 0.0
  %222 = vmatprep.subr.mxu0 0.0
  %223 = vmatpush1.msra.mxu0 0.0
  %224 = vmatprep.subr.mxu0 0.0
  %225 = vmatpush1.msra.mxu0 0.0
  %226 = vmatprep.subr.mxu0 0.0
  %227 = vmatpush1.msra.mxu0 0.0
  %228 = vmatprep.subr.mxu0 0.0
  %229 = vmatpush1.msra.mxu0 0.0
  %230 = vmatprep.subr.mxu0 0.0
  %231 = vmatpush1.msra.mxu0 0.0
  %232 = vmatprep.subr.mxu0 0.0
  %233 = vmatpush1.msra.mxu0 0.0
  %234 = vmatprep.subr.mxu0 0.0
  %235 = vmatpush1.msra.mxu0 0.0
  %236 = vmatprep.subr.mxu0 0.0
  %237 = vmatpush1.msra.mxu0 0.0
  %238 = vmatprep.subr.mxu0 0.0
  %239 = vmatpush1.msra.mxu0 0.0
  %240 = vmatprep.subr.mxu0 0.0
  %241 = vmatpush1.msra.mxu0 0.0
  %242 = vmatprep.subr.mxu0 0.0
  %243 = vmatpush1.msra.mxu0 0.0
  %244 = vmatprep.subr.mxu0 0.0
  %245 = vmatpush1.msra.mxu0 0.0
  %246 = vmatprep.subr.mxu0 0.0
  %247 = vmatpush1.msra.mxu0 0.0
  %248 = vmatprep.subr.mxu0 0.0
  %249 = vmatpush1.msra.mxu0 0.0
  %250 = vmatprep.mubr.f32.mxu0 0.0
  %251 = vmatmul.mubr.f32.gmra.mrb[0].mxu0 %v180
  %v252 = vpop.f32.mrb[0].mxu0
  %v253 = vadd.f32 %v176, %v252
  %v254 = vpop.f32.mrb[0].mxu0
  %255 = vdwg.mxu0
  %256 = vst [vmem:[%s7] sm:$0xff] %v253
  // Predicated region
  $region30: #{mlp_forward.1} parent=0 // pred_check
    _
  $region31: #{mlp_forward.1} parent=0 // pred_check_branch
    %258 = sbr.rel (0) target = $region33
  $region32: #{mlp_forward.1} parent=0 // pred_region
    _
  $region33: #{mlp_forward.1} parent=0 // pred_fallthru
    _
  // Predicated region
  $region34: #{mlp_forward.1} parent=0 // pred_check
    _
  $region35: #{mlp_forward.1} parent=0 // pred_check_branch
    %260 = sbr.rel (0) target = $region37
  $region36: #{mlp_forward.1} parent=0 // pred_region
    _
  $region37: #{mlp_forward.1} parent=0 // pred_fallthru
    _

</llo_original>
